<compile_context>
chip_gen: v7x
topology: tpu7x:2x2x1
jax: 0.10.0
libtpu: 0.0.40
codegen_flags: <defaults>
</compile_context>

<pallas_src>
import functools

import jax
import jax.numpy as jnp
from jax.experimental import pallas as pl
from jax.experimental.pallas import tpu as pltpu  # noqa: F401  (kept for TPU-specific tuning hooks)


def _surrogate_kernel(x_ref, w_ref, o_ref, *, S, B, E, H, FP):
    """x_ref: (S*B, FP) time-major inputs; w_ref: (R, 4H) packed weight slab; o_ref: (B, 1)."""
    # --- static views into the packed weight slab (one DMA, sliced in VMEM) ---------
    r_wx = 0                 # (E, 4H)  input->gate weights, gate order (i, f, o, g*2)
    r_wh = E                 # (H, 4H)  hidden->gate weights, gate order (i, f, o, g*2)
    r_bg = E + H             # (1, 4H)  fused gate biases (b_ih + b_hh), g entries *2
    r_wemb = r_bg + 1        # (FP, 4H) embedding weight (transposed), zero-padded rows/lanes
    r_bemb = r_wemb + FP     # (1, 4H)  embedding bias in the first E lanes
    r_wout = r_bemb + 1      # (1, 4H)  hid2val weight row in the first H lanes
    r_bout = r_wout + 1      # (1, 4H)  hid2val bias in lane 0

    wx = w_ref[r_wx:r_wh, :]                    # (E, 4H)
    wh = w_ref[r_wh:r_bg, :]                    # (H, 4H)
    bg = w_ref[r_bg:r_bg + 1, :]                # (1, 4H)
    wemb = w_ref[r_wemb:r_bemb, :E]             # (FP, E)
    bemb = w_ref[r_bemb:r_bemb + 1, :E]         # (1, E)
    wout = w_ref[r_wout:r_wout + 1, :H]         # (1, H)
    bout = w_ref[r_bout:r_bout + 1, 0:1]        # (1, 1)

    # --- hoisted, non-recurrent work (amortized over all timesteps) -----------------
    # Embedding for every (t, b) at once: (S*B, FP) @ (FP, E) -> sigmoid.
    e_all = jax.nn.sigmoid(
        jnp.dot(x_ref[...], wemb, preferred_element_type=jnp.float32) + bemb
    )
    # Input-side gate pre-activations for every timestep, biases folded in once.
    z_all = jnp.dot(e_all, wx, preferred_element_type=jnp.float32) + bg   # (S*B, 4H)

    h = jnp.zeros((B, H), jnp.float32)
    c = jnp.zeros((B, H), jnp.float32)

    # --- serial recurrence: one (B,H)@(H,4H) dot + one full-vreg sigmoid per step ---
    # S is small and compile-time constant; static unroll keeps LLO visibility.
    for t in range(S):
        z = z_all[t * B:(t + 1) * B, :] + jnp.dot(
            h, wh, preferred_element_type=jnp.float32
        )  # (B, 4H); g-gate lanes carry 2*z_g thanks to the pre-scaled weights.
        s = jax.nn.sigmoid(z)                    # single full-vreg EUP pass
        i_g = s[:, :H]
        f_g = s[:, H:2 * H]
        o_g = s[:, 2 * H:3 * H]
        g_g = 2.0 * s[:, 3 * H:] - 1.0           # tanh(z_g) = 2*sigmoid(2*z_g) - 1 (VPU FMA)
        c = f_g * c + i_g * g_g
        h = o_g * jnp.tanh(c)

    # --- hid2val: VPU multiply + lane reduce instead of an N=1 MXU matmul -----------
    val = jax.nn.sigmoid(jnp.sum(h * wout, axis=-1, keepdims=True) + bout)
    o_ref[...] = val.astype(o_ref.dtype)


@functools.partial(jax.jit, static_argnames=("E", "H", "FP"))
def surrogate_forward(x, slab, *, E, H, FP):
    """x: (S, B, F) float32 time-major (like nn.LSTM input). Returns (B, 1)."""
    S, B, F = x.shape
    # Pad batch to a multiple of 8 sublanes and features to FP lanes (zero rows in the
    # packed embedding weight make the padding exact); padded rows are sliced off after.
    Bp = ((B + 7) // 8) * 8
    xp = jnp.zeros((S, Bp, FP), x.dtype).at[:, :B, :F].set(x)
    x2 = xp.reshape(S * Bp, FP)

    out = pl.pallas_call(
        functools.partial(_surrogate_kernel, S=S, B=Bp, E=E, H=H, FP=FP),
        out_shape=jax.ShapeDtypeStruct((Bp, 1), jnp.float32),
    )(x2, slab)
    return out[:B]


def make_raw_params(key, number_input_feats=3, size_embedding=32, num_hidden=32):
    """Deterministic raw parameters mirroring the PyTorch module's __init__."""
    ks = jax.random.split(key, 6)
    F, E, H = number_input_feats, size_embedding, num_hidden

    # nn.Linear layers: weight ~ U(-0.1, 0.1), bias = 1.8 (per the module's init loop).
    w_emb = jax.random.uniform(ks[0], (E, F), jnp.float32, -0.1, 0.1)
    b_emb = jnp.full((E,), 1.8, jnp.float32)
    w_out = jax.random.uniform(ks[1], (1, H), jnp.float32, -0.1, 0.1)
    b_out = jnp.full((1,), 1.8, jnp.float32)

    # nn.LSTM default init: U(-1/sqrt(H), 1/sqrt(H)); PyTorch gate order i, f, g, o.
    k = 1.0 / jnp.sqrt(jnp.float32(H))
    w_ih = jax.random.uniform(ks[2], (4 * H, E), jnp.float32, -k, k)
    w_hh = jax.random.uniform(ks[3], (4 * H, H), jnp.float32, -k, k)
    b_ih = jax.random.uniform(ks[4], (4 * H,), jnp.float32, -k, k)
    b_hh = jax.random.uniform(ks[5], (4 * H,), jnp.float32, -k, k)
    return dict(w_emb=w_emb, b_emb=b_emb, w_ih=w_ih, w_hh=w_hh,
                b_ih=b_ih, b_hh=b_hh, w_out=w_out, b_out=b_out, H=H, E=E)


def pack_params(raw):
    """Repack raw PyTorch-layout params into one lane-aligned (R, 4H) f32 weight slab.

    Gate order is remapped (i, f, g, o) -> (i, f, o, g), and the g-gate columns/biases are
    scaled by 2 so the kernel can apply one sigmoid to the whole 4H-lane vreg and recover
    tanh via 2*sigmoid(2x) - 1.
    """
    H, E = raw["H"], raw["E"]
    F = raw["w_emb"].shape[1]
    FP = 8                      # feature dim padded to one full sublane tile
    L = 4 * H                   # lane width of the slab (128 for H=32)
    assert E <= L and H <= L and F <= FP

    def split4(a):
        return tuple(a[g * H:(g + 1) * H] for g in range(4))   # i, f, g, o (PyTorch order)

    wi, wf, wg, wo = split4(raw["w_ih"])
    ui, uf, ug, uo = split4(raw["w_hh"])
    bii, bfi, bgi, boi = split4(raw["b_ih"])
    bih, bfh, bgh, boh = split4(raw["b_hh"])

    wx_cat = jnp.concatenate([wi.T, wf.T, wo.T, 2.0 * wg.T], axis=1)   # (E, 4H)
    wh_cat = jnp.concatenate([ui.T, uf.T, uo.T, 2.0 * ug.T], axis=1)   # (H, 4H)
    b_cat = jnp.concatenate(
        [bii + bih, bfi + bfh, boi + boh, 2.0 * (bgi + bgh)]).reshape(1, L)

    wemb_pad = jnp.zeros((FP, L), jnp.float32).at[:F, :E].set(raw["w_emb"].T)
    bemb_pad = jnp.zeros((1, L), jnp.float32).at[:, :E].set(raw["b_emb"].reshape(1, E))
    wout_pad = jnp.zeros((1, L), jnp.float32).at[:, :H].set(raw["w_out"].reshape(1, H))
    bout_pad = jnp.zeros((1, L), jnp.float32).at[:, :1].set(raw["b_out"].reshape(1, 1))

    slab = jnp.concatenate(
        [wx_cat, wh_cat, b_cat, wemb_pad, bemb_pad, wout_pad, bout_pad], axis=0)
    R = slab.shape[0]
    Rp = ((R + 7) // 8) * 8
    if Rp != R:
        slab = jnp.concatenate([slab, jnp.zeros((Rp - R, L), jnp.float32)], axis=0)
    return slab, dict(E=E, H=H, FP=FP)


def surrogate_reference(x, raw):
    """Pure-JAX reference of the PyTorch forward (gate order i, f, g, o)."""
    H = raw["H"]
    w_emb, b_emb = raw["w_emb"], raw["b_emb"]
    w_ih, w_hh = raw["w_ih"], raw["w_hh"]
    b = raw["b_ih"] + raw["b_hh"]
    w_out, b_out = raw["w_out"], raw["b_out"]

    S, B, _ = x.shape
    h = jnp.zeros((B, H), jnp.float32)
    c = jnp.zeros((B, H), jnp.float32)
    for t in range(S):
        e = jax.nn.sigmoid(x[t] @ w_emb.T + b_emb)
        z = e @ w_ih.T + h @ w_hh.T + b           # (B, 4H), order i, f, g, o
        i_g = jax.nn.sigmoid(z[:, :H])
        f_g = jax.nn.sigmoid(z[:, H:2 * H])
        g_g = jnp.tanh(z[:, 2 * H:3 * H])
        o_g = jax.nn.sigmoid(z[:, 3 * H:])
        c = f_g * c + i_g * g_g
        h = o_g * jnp.tanh(c)
    return jax.nn.sigmoid(h @ w_out.T + b_out)


if __name__ == "__main__":
    SEQ, BATCH, FEATS, EMB, HID = 8, 2, 3, 32, 32
    key = jax.random.PRNGKey(0)
    k_x, k_p = jax.random.split(key)

    # Synthetic "sequence of operations": (seq_len, batch, number_input_feats)
    x = jax.random.uniform(k_x, (SEQ, BATCH, FEATS), jnp.float32, 0.0, 3.0)
    raw = make_raw_params(k_p, number_input_feats=FEATS,
                          size_embedding=EMB, num_hidden=HID)
    slab, meta = pack_params(raw)

    out = surrogate_forward(x, slab, E=meta["E"], H=meta["H"], FP=meta["FP"])
    out = jax.block_until_ready(out)

    ref = surrogate_reference(x, raw)
    assert out.shape == (BATCH, 1)
    assert jnp.allclose(out, ref, atol=1e-4, rtol=1e-4), (out, ref)

    print("KERNEL_OK")
</pallas_src>

<mosaic_0001>
module attributes {stable_mosaic.version = 11 : i64} {
  func.func @_surrogate_kernel(%arg0: memref<64x8xf32, #tpu.memory_space<vmem>>, %arg1: memref<80x128xf32, #tpu.memory_space<vmem>>, %arg2: memref<8x1xf32, #tpu.memory_space<vmem>>) attributes {dimension_semantics = [], scalar_prefetch = 0 : i64, scratch_operands = 0 : i64, tpu.core_type = #tpu.core_type<tc>} {
    %c0 = arith.constant 0 : index
    %c0_0 = arith.constant 0 : index
    %0 = vector.load %arg1[%c0, %c0_0] : memref<80x128xf32, #tpu.memory_space<vmem>>, vector<32x128xf32>
    %c32 = arith.constant 32 : index
    %c0_1 = arith.constant 0 : index
    %1 = vector.load %arg1[%c32, %c0_1] : memref<80x128xf32, #tpu.memory_space<vmem>>, vector<32x128xf32>
    %c64 = arith.constant 64 : index
    %c0_2 = arith.constant 0 : index
    %2 = vector.load %arg1[%c64, %c0_2] : memref<80x128xf32, #tpu.memory_space<vmem>>, vector<1x128xf32>
    %c65 = arith.constant 65 : index
    %c0_3 = arith.constant 0 : index
    %3 = vector.load %arg1[%c65, %c0_3] : memref<80x128xf32, #tpu.memory_space<vmem>>, vector<8x32xf32>
    %c73 = arith.constant 73 : index
    %c0_4 = arith.constant 0 : index
    %4 = vector.load %arg1[%c73, %c0_4] : memref<80x128xf32, #tpu.memory_space<vmem>>, vector<1x32xf32>
    %c74 = arith.constant 74 : index
    %c0_5 = arith.constant 0 : index
    %5 = vector.load %arg1[%c74, %c0_5] : memref<80x128xf32, #tpu.memory_space<vmem>>, vector<1x32xf32>
    %c75 = arith.constant 75 : index
    %c0_6 = arith.constant 0 : index
    %6 = vector.load %arg1[%c75, %c0_6] : memref<80x128xf32, #tpu.memory_space<vmem>>, vector<1x1xf32>
    %c0_7 = arith.constant 0 : index
    %c0_8 = arith.constant 0 : index
    %7 = vector.load %arg0[%c0_7, %c0_8] : memref<64x8xf32, #tpu.memory_space<vmem>>, vector<64x8xf32>
    %cst = arith.constant dense<0.000000e+00> : vector<64x32xf32>
    %8 = tpu.matmul %7, %3, %cst {dimension_numbers = #tpu.dot_dimension_numbers<[1], [0], [0], [1], [0, 0, 1, 1], [], []>} : vector<64x8xf32>, vector<8x32xf32>, vector<64x32xf32> -> vector<64x32xf32>
    %9 = vector.broadcast %4 : vector<1x32xf32> to vector<64x32xf32>
    %10 = arith.addf %8, %9 : vector<64x32xf32>
    %11 = arith.negf %10 : vector<64x32xf32>
    %12 = math.exp %11 : vector<64x32xf32>
    %cst_9 = arith.constant 1.000000e+00 : f32
    %13 = vector.broadcast %cst_9 : f32 to vector<64x32xf32>
    %14 = arith.addf %13, %12 : vector<64x32xf32>
    %15 = arith.divf %13, %14 : vector<64x32xf32>
    %cst_10 = arith.constant dense<0.000000e+00> : vector<64x128xf32>
    %16 = tpu.matmul %15, %0, %cst_10 {dimension_numbers = #tpu.dot_dimension_numbers<[1], [0], [0], [1], [0, 0, 1, 1], [], []>} : vector<64x32xf32>, vector<32x128xf32>, vector<64x128xf32> -> vector<64x128xf32>
    %17 = vector.broadcast %2 : vector<1x128xf32> to vector<64x128xf32>
    %18 = arith.addf %16, %17 : vector<64x128xf32>
    %cst_11 = arith.constant 0.000000e+00 : f32
    %19 = vector.broadcast %cst_11 : f32 to vector<8x32xf32>
    %cst_12 = arith.constant 0.000000e+00 : f32
    %20 = vector.broadcast %cst_12 : f32 to vector<8x32xf32>
    %21 = vector.extract_strided_slice %18 {offsets = [0, 0], sizes = [8, 128], strides = [1, 1]} : vector<64x128xf32> to vector<8x128xf32>
    %cst_13 = arith.constant dense<0.000000e+00> : vector<8x128xf32>
    %22 = tpu.matmul %19, %1, %cst_13 {dimension_numbers = #tpu.dot_dimension_numbers<[1], [0], [0], [1], [0, 0, 1, 1], [], []>} : vector<8x32xf32>, vector<32x128xf32>, vector<8x128xf32> -> vector<8x128xf32>
    %23 = arith.addf %21, %22 : vector<8x128xf32>
    %24 = arith.negf %23 : vector<8x128xf32>
    %25 = math.exp %24 : vector<8x128xf32>
    %cst_14 = arith.constant 1.000000e+00 : f32
    %26 = vector.broadcast %cst_14 : f32 to vector<8x128xf32>
    %27 = arith.addf %26, %25 : vector<8x128xf32>
    %28 = arith.divf %26, %27 : vector<8x128xf32>
    %29 = vector.extract_strided_slice %28 {offsets = [0, 0], sizes = [8, 32], strides = [1, 1]} : vector<8x128xf32> to vector<8x32xf32>
    %30 = vector.extract_strided_slice %28 {offsets = [0, 32], sizes = [8, 32], strides = [1, 1]} : vector<8x128xf32> to vector<8x32xf32>
    %31 = vector.extract_strided_slice %28 {offsets = [0, 64], sizes = [8, 32], strides = [1, 1]} : vector<8x128xf32> to vector<8x32xf32>
    %32 = vector.extract_strided_slice %28 {offsets = [0, 96], sizes = [8, 32], strides = [1, 1]} : vector<8x128xf32> to vector<8x32xf32>
    %cst_15 = arith.constant 2.000000e+00 : f32
    %33 = vector.broadcast %cst_15 : f32 to vector<8x32xf32>
    %34 = arith.mulf %33, %32 : vector<8x32xf32>
    %cst_16 = arith.constant 1.000000e+00 : f32
    %35 = vector.broadcast %cst_16 : f32 to vector<8x32xf32>
    %36 = arith.subf %34, %35 : vector<8x32xf32>
    %37 = arith.mulf %30, %20 : vector<8x32xf32>
    %38 = arith.mulf %29, %36 : vector<8x32xf32>
    %39 = arith.addf %37, %38 : vector<8x32xf32>
    %40 = math.tanh %39 : vector<8x32xf32>
    %41 = arith.mulf %31, %40 : vector<8x32xf32>
    %42 = vector.extract_strided_slice %18 {offsets = [8, 0], sizes = [8, 128], strides = [1, 1]} : vector<64x128xf32> to vector<8x128xf32>
    %cst_17 = arith.constant dense<0.000000e+00> : vector<8x128xf32>
    %43 = tpu.matmul %41, %1, %cst_17 {dimension_numbers = #tpu.dot_dimension_numbers<[1], [0], [0], [1], [0, 0, 1, 1], [], []>} : vector<8x32xf32>, vector<32x128xf32>, vector<8x128xf32> -> vector<8x128xf32>
    %44 = arith.addf %42, %43 : vector<8x128xf32>
    %45 = arith.negf %44 : vector<8x128xf32>
    %46 = math.exp %45 : vector<8x128xf32>
    %cst_18 = arith.constant 1.000000e+00 : f32
    %47 = vector.broadcast %cst_18 : f32 to vector<8x128xf32>
    %48 = arith.addf %47, %46 : vector<8x128xf32>
    %49 = arith.divf %47, %48 : vector<8x128xf32>
    %50 = vector.extract_strided_slice %49 {offsets = [0, 0], sizes = [8, 32], strides = [1, 1]} : vector<8x128xf32> to vector<8x32xf32>
    %51 = vector.extract_strided_slice %49 {offsets = [0, 32], sizes = [8, 32], strides = [1, 1]} : vector<8x128xf32> to vector<8x32xf32>
    %52 = vector.extract_strided_slice %49 {offsets = [0, 64], sizes = [8, 32], strides = [1, 1]} : vector<8x128xf32> to vector<8x32xf32>
    %53 = vector.extract_strided_slice %49 {offsets = [0, 96], sizes = [8, 32], strides = [1, 1]} : vector<8x128xf32> to vector<8x32xf32>
    %cst_19 = arith.constant 2.000000e+00 : f32
    %54 = vector.broadcast %cst_19 : f32 to vector<8x32xf32>
    %55 = arith.mulf %54, %53 : vector<8x32xf32>
    %cst_20 = arith.constant 1.000000e+00 : f32
    %56 = vector.broadcast %cst_20 : f32 to vector<8x32xf32>
    %57 = arith.subf %55, %56 : vector<8x32xf32>
    %58 = arith.mulf %51, %39 : vector<8x32xf32>
    %59 = arith.mulf %50, %57 : vector<8x32xf32>
    %60 = arith.addf %58, %59 : vector<8x32xf32>
    %61 = math.tanh %60 : vector<8x32xf32>
    %62 = arith.mulf %52, %61 : vector<8x32xf32>
    %63 = vector.extract_strided_slice %18 {offsets = [16, 0], sizes = [8, 128], strides = [1, 1]} : vector<64x128xf32> to vector<8x128xf32>
    %cst_21 = arith.constant dense<0.000000e+00> : vector<8x128xf32>
    %64 = tpu.matmul %62, %1, %cst_21 {dimension_numbers = #tpu.dot_dimension_numbers<[1], [0], [0], [1], [0, 0, 1, 1], [], []>} : vector<8x32xf32>, vector<32x128xf32>, vector<8x128xf32> -> vector<8x128xf32>
    %65 = arith.addf %63, %64 : vector<8x128xf32>
    %66 = arith.negf %65 : vector<8x128xf32>
    %67 = math.exp %66 : vector<8x128xf32>
    %cst_22 = arith.constant 1.000000e+00 : f32
    %68 = vector.broadcast %cst_22 : f32 to vector<8x128xf32>
    %69 = arith.addf %68, %67 : vector<8x128xf32>
    %70 = arith.divf %68, %69 : vector<8x128xf32>
    %71 = vector.extract_strided_slice %70 {offsets = [0, 0], sizes = [8, 32], strides = [1, 1]} : vector<8x128xf32> to vector<8x32xf32>
    %72 = vector.extract_strided_slice %70 {offsets = [0, 32], sizes = [8, 32], strides = [1, 1]} : vector<8x128xf32> to vector<8x32xf32>
    %73 = vector.extract_strided_slice %70 {offsets = [0, 64], sizes = [8, 32], strides = [1, 1]} : vector<8x128xf32> to vector<8x32xf32>
    %74 = vector.extract_strided_slice %70 {offsets = [0, 96], sizes = [8, 32], strides = [1, 1]} : vector<8x128xf32> to vector<8x32xf32>
    %cst_23 = arith.constant 2.000000e+00 : f32
    %75 = vector.broadcast %cst_23 : f32 to vector<8x32xf32>
    %76 = arith.mulf %75, %74 : vector<8x32xf32>
    %cst_24 = arith.constant 1.000000e+00 : f32
    %77 = vector.broadcast %cst_24 : f32 to vector<8x32xf32>
    %78 = arith.subf %76, %77 : vector<8x32xf32>
    %79 = arith.mulf %72, %60 : vector<8x32xf32>
    %80 = arith.mulf %71, %78 : vector<8x32xf32>
    %81 = arith.addf %79, %80 : vector<8x32xf32>
    %82 = math.tanh %81 : vector<8x32xf32>
    %83 = arith.mulf %73, %82 : vector<8x32xf32>
    %84 = vector.extract_strided_slice %18 {offsets = [24, 0], sizes = [8, 128], strides = [1, 1]} : vector<64x128xf32> to vector<8x128xf32>
    %cst_25 = arith.constant dense<0.000000e+00> : vector<8x128xf32>
    %85 = tpu.matmul %83, %1, %cst_25 {dimension_numbers = #tpu.dot_dimension_numbers<[1], [0], [0], [1], [0, 0, 1, 1], [], []>} : vector<8x32xf32>, vector<32x128xf32>, vector<8x128xf32> -> vector<8x128xf32>
    %86 = arith.addf %84, %85 : vector<8x128xf32>
    %87 = arith.negf %86 : vector<8x128xf32>
    %88 = math.exp %87 : vector<8x128xf32>
    %cst_26 = arith.constant 1.000000e+00 : f32
    %89 = vector.broadcast %cst_26 : f32 to vector<8x128xf32>
    %90 = arith.addf %89, %88 : vector<8x128xf32>
    %91 = arith.divf %89, %90 : vector<8x128xf32>
    %92 = vector.extract_strided_slice %91 {offsets = [0, 0], sizes = [8, 32], strides = [1, 1]} : vector<8x128xf32> to vector<8x32xf32>
    %93 = vector.extract_strided_slice %91 {offsets = [0, 32], sizes = [8, 32], strides = [1, 1]} : vector<8x128xf32> to vector<8x32xf32>
    %94 = vector.extract_strided_slice %91 {offsets = [0, 64], sizes = [8, 32], strides = [1, 1]} : vector<8x128xf32> to vector<8x32xf32>
    %95 = vector.extract_strided_slice %91 {offsets = [0, 96], sizes = [8, 32], strides = [1, 1]} : vector<8x128xf32> to vector<8x32xf32>
    %cst_27 = arith.constant 2.000000e+00 : f32
    %96 = vector.broadcast %cst_27 : f32 to vector<8x32xf32>
    %97 = arith.mulf %96, %95 : vector<8x32xf32>
    %cst_28 = arith.constant 1.000000e+00 : f32
    %98 = vector.broadcast %cst_28 : f32 to vector<8x32xf32>
    %99 = arith.subf %97, %98 : vector<8x32xf32>
    %100 = arith.mulf %93, %81 : vector<8x32xf32>
    %101 = arith.mulf %92, %99 : vector<8x32xf32>
    %102 = arith.addf %100, %101 : vector<8x32xf32>
    %103 = math.tanh %102 : vector<8x32xf32>
    %104 = arith.mulf %94, %103 : vector<8x32xf32>
    %105 = vector.extract_strided_slice %18 {offsets = [32, 0], sizes = [8, 128], strides = [1, 1]} : vector<64x128xf32> to vector<8x128xf32>
    %cst_29 = arith.constant dense<0.000000e+00> : vector<8x128xf32>
    %106 = tpu.matmul %104, %1, %cst_29 {dimension_numbers = #tpu.dot_dimension_numbers<[1], [0], [0], [1], [0, 0, 1, 1], [], []>} : vector<8x32xf32>, vector<32x128xf32>, vector<8x128xf32> -> vector<8x128xf32>
    %107 = arith.addf %105, %106 : vector<8x128xf32>
    %108 = arith.negf %107 : vector<8x128xf32>
    %109 = math.exp %108 : vector<8x128xf32>
    %cst_30 = arith.constant 1.000000e+00 : f32
    %110 = vector.broadcast %cst_30 : f32 to vector<8x128xf32>
    %111 = arith.addf %110, %109 : vector<8x128xf32>
    %112 = arith.divf %110, %111 : vector<8x128xf32>
    %113 = vector.extract_strided_slice %112 {offsets = [0, 0], sizes = [8, 32], strides = [1, 1]} : vector<8x128xf32> to vector<8x32xf32>
    %114 = vector.extract_strided_slice %112 {offsets = [0, 32], sizes = [8, 32], strides = [1, 1]} : vector<8x128xf32> to vector<8x32xf32>
    %115 = vector.extract_strided_slice %112 {offsets = [0, 64], sizes = [8, 32], strides = [1, 1]} : vector<8x128xf32> to vector<8x32xf32>
    %116 = vector.extract_strided_slice %112 {offsets = [0, 96], sizes = [8, 32], strides = [1, 1]} : vector<8x128xf32> to vector<8x32xf32>
    %cst_31 = arith.constant 2.000000e+00 : f32
    %117 = vector.broadcast %cst_31 : f32 to vector<8x32xf32>
    %118 = arith.mulf %117, %116 : vector<8x32xf32>
    %cst_32 = arith.constant 1.000000e+00 : f32
    %119 = vector.broadcast %cst_32 : f32 to vector<8x32xf32>
    %120 = arith.subf %118, %119 : vector<8x32xf32>
    %121 = arith.mulf %114, %102 : vector<8x32xf32>
    %122 = arith.mulf %113, %120 : vector<8x32xf32>
    %123 = arith.addf %121, %122 : vector<8x32xf32>
    %124 = math.tanh %123 : vector<8x32xf32>
    %125 = arith.mulf %115, %124 : vector<8x32xf32>
    %126 = vector.extract_strided_slice %18 {offsets = [40, 0], sizes = [8, 128], strides = [1, 1]} : vector<64x128xf32> to vector<8x128xf32>
    %cst_33 = arith.constant dense<0.000000e+00> : vector<8x128xf32>
    %127 = tpu.matmul %125, %1, %cst_33 {dimension_numbers = #tpu.dot_dimension_numbers<[1], [0], [0], [1], [0, 0, 1, 1], [], []>} : vector<8x32xf32>, vector<32x128xf32>, vector<8x128xf32> -> vector<8x128xf32>
    %128 = arith.addf %126, %127 : vector<8x128xf32>
    %129 = arith.negf %128 : vector<8x128xf32>
    %130 = math.exp %129 : vector<8x128xf32>
    %cst_34 = arith.constant 1.000000e+00 : f32
    %131 = vector.broadcast %cst_34 : f32 to vector<8x128xf32>
    %132 = arith.addf %131, %130 : vector<8x128xf32>
    %133 = arith.divf %131, %132 : vector<8x128xf32>
    %134 = vector.extract_strided_slice %133 {offsets = [0, 0], sizes = [8, 32], strides = [1, 1]} : vector<8x128xf32> to vector<8x32xf32>
    %135 = vector.extract_strided_slice %133 {offsets = [0, 32], sizes = [8, 32], strides = [1, 1]} : vector<8x128xf32> to vector<8x32xf32>
    %136 = vector.extract_strided_slice %133 {offsets = [0, 64], sizes = [8, 32], strides = [1, 1]} : vector<8x128xf32> to vector<8x32xf32>
    %137 = vector.extract_strided_slice %133 {offsets = [0, 96], sizes = [8, 32], strides = [1, 1]} : vector<8x128xf32> to vector<8x32xf32>
    %cst_35 = arith.constant 2.000000e+00 : f32
    %138 = vector.broadcast %cst_35 : f32 to vector<8x32xf32>
    %139 = arith.mulf %138, %137 : vector<8x32xf32>
    %cst_36 = arith.constant 1.000000e+00 : f32
    %140 = vector.broadcast %cst_36 : f32 to vector<8x32xf32>
    %141 = arith.subf %139, %140 : vector<8x32xf32>
    %142 = arith.mulf %135, %123 : vector<8x32xf32>
    %143 = arith.mulf %134, %141 : vector<8x32xf32>
    %144 = arith.addf %142, %143 : vector<8x32xf32>
    %145 = math.tanh %144 : vector<8x32xf32>
    %146 = arith.mulf %136, %145 : vector<8x32xf32>
    %147 = vector.extract_strided_slice %18 {offsets = [48, 0], sizes = [8, 128], strides = [1, 1]} : vector<64x128xf32> to vector<8x128xf32>
    %cst_37 = arith.constant dense<0.000000e+00> : vector<8x128xf32>
    %148 = tpu.matmul %146, %1, %cst_37 {dimension_numbers = #tpu.dot_dimension_numbers<[1], [0], [0], [1], [0, 0, 1, 1], [], []>} : vector<8x32xf32>, vector<32x128xf32>, vector<8x128xf32> -> vector<8x128xf32>
    %149 = arith.addf %147, %148 : vector<8x128xf32>
    %150 = arith.negf %149 : vector<8x128xf32>
    %151 = math.exp %150 : vector<8x128xf32>
    %cst_38 = arith.constant 1.000000e+00 : f32
    %152 = vector.broadcast %cst_38 : f32 to vector<8x128xf32>
    %153 = arith.addf %152, %151 : vector<8x128xf32>
    %154 = arith.divf %152, %153 : vector<8x128xf32>
    %155 = vector.extract_strided_slice %154 {offsets = [0, 0], sizes = [8, 32], strides = [1, 1]} : vector<8x128xf32> to vector<8x32xf32>
    %156 = vector.extract_strided_slice %154 {offsets = [0, 32], sizes = [8, 32], strides = [1, 1]} : vector<8x128xf32> to vector<8x32xf32>
    %157 = vector.extract_strided_slice %154 {offsets = [0, 64], sizes = [8, 32], strides = [1, 1]} : vector<8x128xf32> to vector<8x32xf32>
    %158 = vector.extract_strided_slice %154 {offsets = [0, 96], sizes = [8, 32], strides = [1, 1]} : vector<8x128xf32> to vector<8x32xf32>
    %cst_39 = arith.constant 2.000000e+00 : f32
    %159 = vector.broadcast %cst_39 : f32 to vector<8x32xf32>
    %160 = arith.mulf %159, %158 : vector<8x32xf32>
    %cst_40 = arith.constant 1.000000e+00 : f32
    %161 = vector.broadcast %cst_40 : f32 to vector<8x32xf32>
    %162 = arith.subf %160, %161 : vector<8x32xf32>
    %163 = arith.mulf %156, %144 : vector<8x32xf32>
    %164 = arith.mulf %155, %162 : vector<8x32xf32>
    %165 = arith.addf %163, %164 : vector<8x32xf32>
    %166 = math.tanh %165 : vector<8x32xf32>
    %167 = arith.mulf %157, %166 : vector<8x32xf32>
    %168 = vector.extract_strided_slice %18 {offsets = [56, 0], sizes = [8, 128], strides = [1, 1]} : vector<64x128xf32> to vector<8x128xf32>
    %cst_41 = arith.constant dense<0.000000e+00> : vector<8x128xf32>
    %169 = tpu.matmul %167, %1, %cst_41 {dimension_numbers = #tpu.dot_dimension_numbers<[1], [0], [0], [1], [0, 0, 1, 1], [], []>} : vector<8x32xf32>, vector<32x128xf32>, vector<8x128xf32> -> vector<8x128xf32>
    %170 = arith.addf %168, %169 : vector<8x128xf32>
    %171 = arith.negf %170 : vector<8x128xf32>
    %172 = math.exp %171 : vector<8x128xf32>
    %cst_42 = arith.constant 1.000000e+00 : f32
    %173 = vector.broadcast %cst_42 : f32 to vector<8x128xf32>
    %174 = arith.addf %173, %172 : vector<8x128xf32>
    %175 = arith.divf %173, %174 : vector<8x128xf32>
    %176 = vector.extract_strided_slice %175 {offsets = [0, 0], sizes = [8, 32], strides = [1, 1]} : vector<8x128xf32> to vector<8x32xf32>
    %177 = vector.extract_strided_slice %175 {offsets = [0, 32], sizes = [8, 32], strides = [1, 1]} : vector<8x128xf32> to vector<8x32xf32>
    %178 = vector.extract_strided_slice %175 {offsets = [0, 64], sizes = [8, 32], strides = [1, 1]} : vector<8x128xf32> to vector<8x32xf32>
    %179 = vector.extract_strided_slice %175 {offsets = [0, 96], sizes = [8, 32], strides = [1, 1]} : vector<8x128xf32> to vector<8x32xf32>
    %cst_43 = arith.constant 2.000000e+00 : f32
    %180 = vector.broadcast %cst_43 : f32 to vector<8x32xf32>
    %181 = arith.mulf %180, %179 : vector<8x32xf32>
    %cst_44 = arith.constant 1.000000e+00 : f32
    %182 = vector.broadcast %cst_44 : f32 to vector<8x32xf32>
    %183 = arith.subf %181, %182 : vector<8x32xf32>
    %184 = arith.mulf %177, %165 : vector<8x32xf32>
    %185 = arith.mulf %176, %183 : vector<8x32xf32>
    %186 = arith.addf %184, %185 : vector<8x32xf32>
    %187 = math.tanh %186 : vector<8x32xf32>
    %188 = arith.mulf %178, %187 : vector<8x32xf32>
    %189 = vector.broadcast %5 : vector<1x32xf32> to vector<8x32xf32>
    %190 = arith.mulf %188, %189 : vector<8x32xf32>
    %cst_45 = arith.constant dense<0.000000e+00> : vector<8xf32>
    %191 = vector.multi_reduction <add>, %190, %cst_45 [1] : vector<8x32xf32> to vector<8xf32>
    %192 = vector.shape_cast %191 : vector<8xf32> to vector<8x1xf32>
    %193 = vector.broadcast %6 : vector<1x1xf32> to vector<8x1xf32>
    %194 = arith.addf %192, %193 : vector<8x1xf32>
    %195 = arith.negf %194 : vector<8x1xf32>
    %196 = math.exp %195 : vector<8x1xf32>
    %cst_46 = arith.constant 1.000000e+00 : f32
    %197 = vector.broadcast %cst_46 : f32 to vector<8x1xf32>
    %198 = arith.addf %197, %196 : vector<8x1xf32>
    %199 = arith.divf %197, %198 : vector<8x1xf32>
    %c0_47 = arith.constant 0 : index
    %c0_48 = arith.constant 0 : index
    %200 = vector.load %arg2[%c0_47, %c0_48] : memref<8x1xf32, #tpu.memory_space<vmem>>, vector<8x1xf32>
    tpu.vector_store %arg2[%c0_47, %c0_48], %199 {strides = array<i32>} : memref<8x1xf32, #tpu.memory_space<vmem>>, vector<8x1xf32>,
    return
  }
}

</mosaic_0001>

<llo_original>
// kernel: surrogate_forward.1
$region0: #{surrogate_forward.1}
  #allocation0 [shape = 'u32[]', space=smem, size = 0x4, offset = 0x4, fixed_abs, tag = 'smem constant byte address 0x4 - core index']
  #allocation1 [shape = 'u32[144,128]{1,0:T(1,128)}', space=vmem, size = 0x12000, scoped, tag = 'internal scratch']
  %s0 = inlined_call_operand.vmem [shape: f32[64,8], index: 0, kind: input, shape index: {}]
  %s1 = inlined_call_operand.vmem [shape: f32[80,128], index: 1, kind: input, shape index: {}]
  %s2 = inlined_call_operand.vmem [shape: f32[8,1], index: 2, kind: output, shape index: {}]
  %s3 = sld [smem:[#allocation0]]
  $region18: #{surrogate_forward.1} parent=0
    _
  %s5 = ssub.s32 1, %s3
  %s6 = scalar_select 0, %s5, %s3
  // Predicated region
  $region2: #{surrogate_forward.1} parent=0 // pred_check
    _
  $region3: #{surrogate_forward.1} parent=0 // pred_check_branch
    %8 = sbr.rel (0) target = $region5
  $region4: #{surrogate_forward.1} parent=0 // pred_region
    _
  $region5: #{surrogate_forward.1} parent=0 // pred_fallthru
    _
  // Predicated region
  $region6: #{surrogate_forward.1} parent=0 // pred_check
    _
  $region7: #{surrogate_forward.1} parent=0 // pred_check_branch
    %10 = sbr.rel (0) target = $region9
  $region8: #{surrogate_forward.1} parent=0 // pred_region
    _
  $region9: #{surrogate_forward.1} parent=0 // pred_fallthru
    _
  %v11 = vld [vmem:[%s1] sm:$0xff]
  %v12 = vld [vmem:[%s1 + $0x8] sm:$0xff]
  %v13 = vld [vmem:[%s1 + $0x10] sm:$0xff]
  %v14 = vld [vmem:[%s1 + $0x18] sm:$0xff]
  %v15 = vld [vmem:[%s1 + $0x20] sm:$0xff]
  %v16 = vld [vmem:[%s1 + $0x28] sm:$0xff]
  %v17 = vld [vmem:[%s1 + $0x30] sm:$0xff]
  %v18 = vld [vmem:[%s1 + $0x38] sm:$0xff]
  %v19 = vld [vmem:[%s1 + $0x40] sm:$0x1]
  %v20 = vld [vmem:[%s1 + $0x41] sm:$0xff]
  %v21 = vld [vmem:[%s1 + $0x49] sm:$0x1]
  %v22 = vld [vmem:[%s1 + $0x4a] sm:$0x1]
  %v23 = vld [vmem:[%s1 + $0x4b] sm:$0x1]
  %v24 = vld [vmem:[%s0] sm:$0xff]
  %v25 = vld [vmem:[%s0 + $0x8] sm:$0xff]
  %v26 = vld [vmem:[%s0 + $0x10] sm:$0xff]
  %v27 = vld [vmem:[%s0 + $0x18] sm:$0xff]
  %v28 = vld [vmem:[%s0 + $0x20] sm:$0xff]
  %v29 = vld [vmem:[%s0 + $0x28] sm:$0xff]
  %v30 = vld [vmem:[%s0 + $0x30] sm:$0xff]
  %v31 = vld [vmem:[%s0 + $0x38] sm:$0xff]
  %v32 = vlaneseq
  %v33 = vshrl.u32 %v32, 7
  %v34 = vsub.s32 0, %v33
  %v35 = vrot.slane %v21, %v34
  %vm36 = vcmask 64512
  %v38 = vsel %vm36, %v24, 0
  %v41 = vsel %vm36, %v25, 0
  %v44 = vsel %vm36, %v26, 0
  %v47 = vsel %vm36, %v27, 0
  %v50 = vsel %vm36, %v28, 0
  %v53 = vsel %vm36, %v29, 0
  %v56 = vsel %vm36, %v30, 0
  %v59 = vsel %vm36, %v31, 0
  %61 = vmatprep.subr.mxu0 0.0
  %62 = vmatpush1.msra.mxu0 %v20
  %63 = vmatprep.subr.mxu0 0.0
  %64 = vmatpush1.msra.mxu0 0.0
  %65 = vmatprep.subr.mxu0 0.0
  %66 = vmatpush1.msra.mxu0 0.0
  %67 = vmatprep.subr.mxu0 0.0
  %68 = vmatpush1.msra.mxu0 0.0
  %69 = vmatprep.subr.mxu0 0.0
  %70 = vmatpush1.msra.mxu0 0.0
  %71 = vmatprep.subr.mxu0 0.0
  %72 = vmatpush1.msra.mxu0 0.0
  %73 = vmatprep.subr.mxu0 0.0
  %74 = vmatpush1.msra.mxu0 0.0
  %75 = vmatprep.subr.mxu0 0.0
  %76 = vmatpush1.msra.mxu0 0.0
  %77 = vmatprep.subr.mxu0 0.0
  %78 = vmatpush1.msra.mxu0 0.0
  %79 = vmatprep.subr.mxu0 0.0
  %80 = vmatpush1.msra.mxu0 0.0
  %81 = vmatprep.subr.mxu0 0.0
  %82 = vmatpush1.msra.mxu0 0.0
  %83 = vmatprep.subr.mxu0 0.0
  %84 = vmatpush1.msra.mxu0 0.0
  %85 = vmatprep.subr.mxu0 0.0
  %86 = vmatpush1.msra.mxu0 0.0
  %87 = vmatprep.subr.mxu0 0.0
  %88 = vmatpush1.msra.mxu0 0.0
  %89 = vmatprep.subr.mxu0 0.0
  %90 = vmatpush1.msra.mxu0 0.0
  %91 = vmatprep.subr.mxu0 0.0
  %92 = vmatpush1.msra.mxu0 0.0
  %93 = vmatprep.subr.mxu0 0.0
  %94 = vmatpush1.msra.mxu0 0.0
  %95 = vmatprep.subr.mxu0 0.0
  %96 = vmatpush1.msra.mxu0 0.0
  %97 = vmatprep.subr.mxu0 0.0
  %98 = vmatpush1.msra.mxu0 0.0
  %99 = vmatprep.subr.mxu0 0.0
  %100 = vmatpush1.msra.mxu0 0.0
  %101 = vmatprep.subr.mxu0 0.0
  %102 = vmatpush1.msra.mxu0 0.0
  %103 = vmatprep.subr.mxu0 0.0
  %104 = vmatpush1.msra.mxu0 0.0
  %105 = vmatprep.subr.mxu0 0.0
  %106 = vmatpush1.msra.mxu0 0.0
  %107 = vmatprep.subr.mxu0 0.0
  %108 = vmatpush1.msra.mxu0 0.0
  %109 = vmatprep.subr.mxu0 0.0
  %110 = vmatpush1.msra.mxu0 0.0
  %111 = vmatprep.subr.mxu0 0.0
  %112 = vmatpush1.msra.mxu0 0.0
  %113 = vmatprep.subr.mxu0 0.0
  %114 = vmatpush1.msra.mxu0 0.0
  %115 = vmatprep.subr.mxu0 0.0
  %116 = vmatpush1.msra.mxu0 0.0
  %117 = vmatprep.subr.mxu0 0.0
  %118 = vmatpush1.msra.mxu0 0.0
  %119 = vmatprep.subr.mxu0 0.0
  %120 = vmatpush1.msra.mxu0 0.0
  %121 = vmatprep.subr.mxu0 0.0
  %122 = vmatpush1.msra.mxu0 0.0
  %123 = vmatprep.subr.mxu0 0.0
  %124 = vmatpush1.msra.mxu0 0.0
  %125 = vmatprep.mubr.f32.mxu0 0.0
  %126 = vmatmul.mubr.f32.gmra.mrb[0].mxu0 %v38
  %v127 = vpop.f32.mrb[0].mxu0
  %v128 = vadd.f32 %v35, %v127
  %v129 = vpop.f32.mrb[0].mxu0
  %130 = vmatprep.mubr.f32.mxu0 0.0
  %131 = vmatmul.mubr.f32.gmra.mrb[0].mxu0 %v41
  %v132 = vpop.f32.mrb[0].mxu0
  %v133 = vadd.f32 %v35, %v132
  %v134 = vpop.f32.mrb[0].mxu0
  %135 = vmatprep.mubr.f32.mxu0 0.0
  %136 = vmatmul.mubr.f32.gmra.mrb[0].mxu0 %v44
  %v137 = vpop.f32.mrb[0].mxu0
  %v138 = vadd.f32 %v35, %v137
  %v139 = vpop.f32.mrb[0].mxu0
  %140 = vmatprep.mubr.f32.mxu0 0.0
  %141 = vmatmul.mubr.f32.gmra.mrb[0].mxu0 %v47
  %v142 = vpop.f32.mrb[0].mxu0
  %v143 = vadd.f32 %v35, %v142
  %v144 = vpop.f32.mrb[0].mxu0
  %145 = vmatprep.mubr.f32.mxu0 0.0
  %146 = vmatmul.mubr.f32.gmra.mrb[0].mxu0 %v50
  %v147 = vpop.f32.mrb[0].mxu0
  %v148 = vadd.f32 %v35, %v147
  %v149 = vpop.f32.mrb[0].mxu0
  %150 = vmatprep.mubr.f32.mxu0 0.0
  %151 = vmatmul.mubr.f32.gmra.mrb[0].mxu0 %v53
  %v152 = vpop.f32.mrb[0].mxu0
  %v153 = vadd.f32 %v35, %v152
  %v154 = vpop.f32.mrb[0].mxu0
  %155 = vmatprep.mubr.f32.mxu0 0.0
  %156 = vmatmul.mubr.f32.gmra.mrb[0].mxu0 %v56
  %v157 = vpop.f32.mrb[0].mxu0
  %v158 = vadd.f32 %v35, %v157
  %v159 = vpop.f32.mrb[0].mxu0
  %160 = vmatprep.mubr.f32.mxu0 0.0
  %161 = vmatmul.mubr.f32.gmra.mrb[0].mxu0 %v59
  %v162 = vpop.f32.mrb[0].mxu0
  %v163 = vadd.f32 %v35, %v162
  %v164 = vpop.f32.mrb[0].mxu0
  %165 = vdwg.mxu0
  %v166 = vxor.u32 %v128, 2147483648
  %v167 = vxor.u32 %v133, 2147483648
  %v168 = vxor.u32 %v138, 2147483648
  %v169 = vxor.u32 %v143, 2147483648
  %v170 = vxor.u32 %v148, 2147483648
  %v171 = vxor.u32 %v153, 2147483648
  %v172 = vxor.u32 %v158, 2147483648
  %v173 = vxor.u32 %v163, 2147483648
  %v174 = vmul.f32 %v166, 1.442695
  %v175 = vpow.pop %v174
  %v176 = vmul.f32 %v167, 1.442695
  %v177 = vpow.pop %v176
  %v178 = vmul.f32 %v168, 1.442695
  %v179 = vpow.pop %v178
  %v180 = vmul.f32 %v169, 1.442695
  %v181 = vpow.pop %v180
  %v182 = vmul.f32 %v170, 1.442695
  %v183 = vpow.pop %v182
  %v184 = vmul.f32 %v171, 1.442695
  %v185 = vpow.pop %v184
  %v186 = vmul.f32 %v172, 1.442695
  %v187 = vpow.pop %v186
  %v188 = vmul.f32 %v173, 1.442695
  %v189 = vpow.pop %v188
  %v190 = vadd.f32 %v175, 1.0
  %v191 = vadd.f32 %v177, 1.0
  %v192 = vadd.f32 %v179, 1.0
  %v193 = vadd.f32 %v181, 1.0
  %v194 = vadd.f32 %v183, 1.0
  %v195 = vadd.f32 %v185, 1.0
  %v196 = vadd.f32 %v187, 1.0
  %v197 = vadd.f32 %v189, 1.0
  %v198 = vrcp.pop %v190
  %v199 = vmul.f32 1.0, %v198
  %v200 = vrcp.pop %v191
  %v201 = vmul.f32 1.0, %v200
  %v202 = vrcp.pop %v192
  %v203 = vmul.f32 1.0, %v202
  %v204 = vrcp.pop %v193
  %v205 = vmul.f32 1.0, %v204
  %v206 = vrcp.pop %v194
  %v207 = vmul.f32 1.0, %v206
  %v208 = vrcp.pop %v195
  %v209 = vmul.f32 1.0, %v208
  %v210 = vrcp.pop %v196
  %v211 = vmul.f32 1.0, %v210
  %v212 = vrcp.pop %v197
  %v213 = vmul.f32 1.0, %v212
  %v214 = vlaneseq
  %v215 = vshrl.u32 %v214, 7
  %v216 = vsub.s32 0, %v215
  %v217 = vrot.slane %v19, %v216
  %vm218 = vcmask 261120
  %v220 = vsel %vm218, %v199, 0
  %v223 = vsel %vm218, %v201, 0
  %v226 = vsel %vm218, %v203, 0
  %v229 = vsel %vm218, %v205, 0
  %v232 = vsel %vm218, %v207, 0
  %v235 = vsel %vm218, %v209, 0
  %v238 = vsel %vm218, %v211, 0
  %v241 = vsel %vm218, %v213, 0
  %243 = vmatprep.subr.mxu0 0.0
  %244 = vmatpush1.msra.mxu0 %v11
  %245 = vmatprep.subr.mxu0 0.0
  %246 = vmatpush1.msra.mxu0 %v12
  %247 = vmatprep.subr.mxu0 0.0
  %248 = vmatpush1.msra.mxu0 %v13
  %249 = vmatprep.subr.mxu0 0.0
  %250 = vmatpush1.msra.mxu0 %v14
  %251 = vmatprep.subr.mxu0 0.0
  %252 = vmatpush1.msra.mxu0 0.0
  %253 = vmatprep.subr.mxu0 0.0
  %254 = vmatpush1.msra.mxu0 0.0
  %255 = vmatprep.subr.mxu0 0.0
  %256 = vmatpush1.msra.mxu0 0.0
  %257 = vmatprep.subr.mxu0 0.0
  %258 = vmatpush1.msra.mxu0 0.0
  %259 = vmatprep.subr.mxu0 0.0
  %260 = vmatpush1.msra.mxu0 0.0
  %261 = vmatprep.subr.mxu0 0.0
  %262 = vmatpush1.msra.mxu0 0.0
  %263 = vmatprep.subr.mxu0 0.0
  %264 = vmatpush1.msra.mxu0 0.0
  %265 = vmatprep.subr.mxu0 0.0
  %266 = vmatpush1.msra.mxu0 0.0
  %267 = vmatprep.subr.mxu0 0.0
  %268 = vmatpush1.msra.mxu0 0.0
  %269 = vmatprep.subr.mxu0 0.0
  %270 = vmatpush1.msra.mxu0 0.0
  %271 = vmatprep.subr.mxu0 0.0
  %272 = vmatpush1.msra.mxu0 0.0
  %273 = vmatprep.subr.mxu0 0.0
  %274 = vmatpush1.msra.mxu0 0.0
  %275 = vmatprep.subr.mxu0 0.0
  %276 = vmatpush1.msra.mxu0 0.0
  %277 = vmatprep.subr.mxu0 0.0
  %278 = vmatpush1.msra.mxu0 0.0
  %279 = vmatprep.subr.mxu0 0.0
  %280 = vmatpush1.msra.mxu0 0.0
  %281 = vmatprep.subr.mxu0 0.0
  %282 = vmatpush1.msra.mxu0 0.0
  %283 = vmatprep.subr.mxu0 0.0
  %284 = vmatpush1.msra.mxu0 0.0
  %285 = vmatprep.subr.mxu0 0.0
  %286 = vmatpush1.msra.mxu0 0.0
  %287 = vmatprep.subr.mxu0 0.0
  %288 = vmatpush1.msra.mxu0 0.0
  %289 = vmatprep.subr.mxu0 0.0
  %290 = vmatpush1.msra.mxu0 0.0
  %291 = vmatprep.subr.mxu0 0.0
  %292 = vmatpush1.msra.mxu0 0.0
  %293 = vmatprep.subr.mxu0 0.0
  %294 = vmatpush1.msra.mxu0 0.0
  %295 = vmatprep.subr.mxu0 0.0
  %296 = vmatpush1.msra.mxu0 0.0
  %297 = vmatprep.subr.mxu0 0.0
  %298 = vmatpush1.msra.mxu0 0.0
  %299 = vmatprep.subr.mxu0 0.0
  %300 = vmatpush1.msra.mxu0 0.0
  %301 = vmatprep.subr.mxu0 0.0
  %302 = vmatpush1.msra.mxu0 0.0
  %303 = vmatprep.subr.mxu0 0.0
  %304 = vmatpush1.msra.mxu0 0.0
  %305 = vmatprep.subr.mxu0 0.0
  %306 = vmatpush1.msra.mxu0 0.0
  %307 = vmatprep.mubr.f32.mxu0 0.0
  %308 = vmatmul.mubr.f32.gmra.mrb[0].mxu0 %v220
  %v309 = vpop.f32.mrb[0].mxu0
  %v310 = vadd.f32 %v217, %v309
  %v311 = vpop.f32.mrb[0].mxu0
  %312 = vmatprep.mubr.f32.mxu0 0.0
  %313 = vmatmul.mubr.f32.gmra.mrb[0].mxu0 %v223
  %v314 = vpop.f32.mrb[0].mxu0
  %v315 = vadd.f32 %v217, %v314
  %v316 = vpop.f32.mrb[0].mxu0
  %317 = vmatprep.mubr.f32.mxu0 0.0
  %318 = vmatmul.mubr.f32.gmra.mrb[0].mxu0 %v226
  %v319 = vpop.f32.mrb[0].mxu0
  %v320 = vadd.f32 %v217, %v319
  %v321 = vpop.f32.mrb[0].mxu0
  %322 = vmatprep.mubr.f32.mxu0 0.0
  %323 = vmatmul.mubr.f32.gmra.mrb[0].mxu0 %v229
  %v324 = vpop.f32.mrb[0].mxu0
  %v325 = vadd.f32 %v217, %v324
  %v326 = vpop.f32.mrb[0].mxu0
  %327 = vmatprep.mubr.f32.mxu0 0.0
  %328 = vmatmul.mubr.f32.gmra.mrb[0].mxu0 %v232
  %v329 = vpop.f32.mrb[0].mxu0
  %v330 = vadd.f32 %v217, %v329
  %v331 = vpop.f32.mrb[0].mxu0
  %332 = vmatprep.mubr.f32.mxu0 0.0
  %333 = vmatmul.mubr.f32.gmra.mrb[0].mxu0 %v235
  %v334 = vpop.f32.mrb[0].mxu0
  %v335 = vadd.f32 %v217, %v334
  %v336 = vpop.f32.mrb[0].mxu0
  %337 = vmatprep.mubr.f32.mxu0 0.0
  %338 = vmatmul.mubr.f32.gmra.mrb[0].mxu0 %v238
  %v339 = vpop.f32.mrb[0].mxu0
  %v340 = vadd.f32 %v217, %v339
  %v341 = vpop.f32.mrb[0].mxu0
  %342 = vmatprep.mubr.f32.mxu0 0.0
  %343 = vmatmul.mubr.f32.gmra.mrb[0].mxu0 %v241
  %v344 = vpop.f32.mrb[0].mxu0
  %v345 = vadd.f32 %v217, %v344
  %v346 = vpop.f32.mrb[0].mxu0
  %347 = vdwg.mxu0
  %v349 = vsel %vm218, 0.0, 0
  %351 = vmatprep.subr.mxu0 0.0
  %352 = vmatpush1.msra.mxu0 %v15
  %353 = vmatprep.subr.mxu0 0.0
  %354 = vmatpush1.msra.mxu0 %v16
  %355 = vmatprep.subr.mxu0 0.0
  %356 = vmatpush1.msra.mxu0 %v17
  %357 = vmatprep.subr.mxu0 0.0
  %358 = vmatpush1.msra.mxu0 %v18
  %359 = vmatprep.subr.mxu0 0.0
  %360 = vmatpush1.msra.mxu0 0.0
  %361 = vmatprep.subr.mxu0 0.0
  %362 = vmatpush1.msra.mxu0 0.0
  %363 = vmatprep.subr.mxu0 0.0
  %364 = vmatpush1.msra.mxu0 0.0
  %365 = vmatprep.subr.mxu0 0.0
  %366 = vmatpush1.msra.mxu0 0.0
  %367 = vmatprep.subr.mxu0 0.0
  %368 = vmatpush1.msra.mxu0 0.0
  %369 = vmatprep.subr.mxu0 0.0
  %370 = vmatpush1.msra.mxu0 0.0
  %371 = vmatprep.subr.mxu0 0.0
  %372 = vmatpush1.msra.mxu0 0.0
  %373 = vmatprep.subr.mxu0 0.0
  %374 = vmatpush1.msra.mxu0 0.0
  %375 = vmatprep.subr.mxu0 0.0
  %376 = vmatpush1.msra.mxu0 0.0
  %377 = vmatprep.subr.mxu0 0.0
  %378 = vmatpush1.msra.mxu0 0.0
  %379 = vmatprep.subr.mxu0 0.0
  %380 = vmatpush1.msra.mxu0 0.0
  %381 = vmatprep.subr.mxu0 0.0
  %382 = vmatpush1.msra.mxu0 0.0
  %383 = vmatprep.subr.mxu0 0.0
  %384 = vmatpush1.msra.mxu0 0.0
  %385 = vmatprep.subr.mxu0 0.0
  %386 = vmatpush1.msra.mxu0 0.0
  %387 = vmatprep.subr.mxu0 0.0
  %388 = vmatpush1.msra.mxu0 0.0
  %389 = vmatprep.subr.mxu0 0.0
  %390 = vmatpush1.msra.mxu0 0.0
  %391 = vmatprep.subr.mxu0 0.0
  %392 = vmatpush1.msra.mxu0 0.0
  %393 = vmatprep.subr.mxu0 0.0
  %394 = vmatpush1.msra.mxu0 0.0
  %395 = vmatprep.subr.mxu0 0.0
  %396 = vmatpush1.msra.mxu0 0.0
  %397 = vmatprep.subr.mxu0 0.0
  %398 = vmatpush1.msra.mxu0 0.0
  %399 = vmatprep.subr.mxu0 0.0
  %400 = vmatpush1.msra.mxu0 0.0
  %401 = vmatprep.subr.mxu0 0.0
  %402 = vmatpush1.msra.mxu0 0.0
  %403 = vmatprep.subr.mxu0 0.0
  %404 = vmatpush1.msra.mxu0 0.0
  %405 = vmatprep.subr.mxu0 0.0
  %406 = vmatpush1.msra.mxu0 0.0
  %407 = vmatprep.subr.mxu0 0.0
  %408 = vmatpush1.msra.mxu0 0.0
  %409 = vmatprep.subr.mxu0 0.0
  %410 = vmatpush1.msra.mxu0 0.0
  %411 = vmatprep.subr.mxu0 0.0
  %412 = vmatpush1.msra.mxu0 0.0
  %413 = vmatprep.subr.mxu0 0.0
  %414 = vmatpush1.msra.mxu0 0.0
  %415 = vmatprep.mubr.f32.mxu0 0.0
  %416 = vmatmul.mubr.f32.gmra.mrb[0].mxu0 %v349
  %v417 = vpop.f32.mrb[0].mxu0
  %v418 = vadd.f32 0.0, %v417
  %v419 = vpop.f32.mrb[0].mxu0
  %420 = vdwg.mxu0
  %v421 = vadd.f32 %v310, %v418
  %v422 = vxor.u32 %v421, 2147483648
  %v423 = vmul.f32 %v422, 1.442695
  %v424 = vpow.pop %v423
  %v425 = vadd.f32 %v424, 1.0
  %v426 = vrcp.pop %v425
  %v427 = vmul.f32 1.0, %v426
  %v428 = vmul.f32 %v427, 2.0
  %v429 = vsub.f32 %v428, 1.0
  %v430 = vmul.f32 %v427, 0.0
  %432 = vrot.lane.b32.xlu0 %v429, 32
  %v433 = vpop.permute.xlu0 %432
  %v435 = vmul.f32 %v427, %v433
  %437 = vrot.lane.b32.xlu0 %v435, 32
  %v438 = vpop.permute.xlu0 %437
  %v440 = vadd.f32 %v430, %v438
  %v441 = vtanh.pop %v440
  %443 = vrot.lane.b32.xlu0 %v441, 32
  %v444 = vpop.permute.xlu0 %443
  %v446 = vmul.f32 %v427, %v444
  %448 = vrot.lane.b32.xlu0 %v446, 64
  %v449 = vpop.permute.xlu0 %448
  %v450 = vsel %vm218, %v449, 0
  %452 = vmatprep.subr.mxu0 0.0
  %453 = vmatpush1.msra.mxu0 %v15
  %454 = vmatprep.subr.mxu0 0.0
  %455 = vmatpush1.msra.mxu0 %v16
  %456 = vmatprep.subr.mxu0 0.0
  %457 = vmatpush1.msra.mxu0 %v17
  %458 = vmatprep.subr.mxu0 0.0
  %459 = vmatpush1.msra.mxu0 %v18
  %460 = vmatprep.subr.mxu0 0.0
  %461 = vmatpush1.msra.mxu0 0.0
  %462 = vmatprep.subr.mxu0 0.0
  %463 = vmatpush1.msra.mxu0 0.0
  %464 = vmatprep.subr.mxu0 0.0
  %465 = vmatpush1.msra.mxu0 0.0
  %466 = vmatprep.subr.mxu0 0.0
  %467 = vmatpush1.msra.mxu0 0.0
  %468 = vmatprep.subr.mxu0 0.0
  %469 = vmatpush1.msra.mxu0 0.0
  %470 = vmatprep.subr.mxu0 0.0
  %471 = vmatpush1.msra.mxu0 0.0
  %472 = vmatprep.subr.mxu0 0.0
  %473 = vmatpush1.msra.mxu0 0.0
  %474 = vmatprep.subr.mxu0 0.0
  %475 = vmatpush1.msra.mxu0 0.0
  %476 = vmatprep.subr.mxu0 0.0
  %477 = vmatpush1.msra.mxu0 0.0
  %478 = vmatprep.subr.mxu0 0.0
  %479 = vmatpush1.msra.mxu0 0.0
  %480 = vmatprep.subr.mxu0 0.0
  %481 = vmatpush1.msra.mxu0 0.0
  %482 = vmatprep.subr.mxu0 0.0
  %483 = vmatpush1.msra.mxu0 0.0
  %484 = vmatprep.subr.mxu0 0.0
  %485 = vmatpush1.msra.mxu0 0.0
  %486 = vmatprep.subr.mxu0 0.0
  %487 = vmatpush1.msra.mxu0 0.0
  %488 = vmatprep.subr.mxu0 0.0
  %489 = vmatpush1.msra.mxu0 0.0
  %490 = vmatprep.subr.mxu0 0.0
  %491 = vmatpush1.msra.mxu0 0.0
  %492 = vmatprep.subr.mxu0 0.0
  %493 = vmatpush1.msra.mxu0 0.0
  %494 = vmatprep.subr.mxu0 0.0
  %495 = vmatpush1.msra.mxu0 0.0
  %496 = vmatprep.subr.mxu0 0.0
  %497 = vmatpush1.msra.mxu0 0.0
  %498 = vmatprep.subr.mxu0 0.0
  %499 = vmatpush1.msra.mxu0 0.0
  %500 = vmatprep.subr.mxu0 0.0
  %501 = vmatpush1.msra.mxu0 0.0
  %502 = vmatprep.subr.mxu0 0.0
  %503 = vmatpush1.msra.mxu0 0.0
  %504 = vmatprep.subr.mxu0 0.0
  %505 = vmatpush1.msra.mxu0 0.0
  %506 = vmatprep.subr.mxu0 0.0
  %507 = vmatpush1.msra.mxu0 0.0
  %508 = vmatprep.subr.mxu0 0.0
  %509 = vmatpush1.msra.mxu0 0.0
  %510 = vmatprep.subr.mxu0 0.0
  %511 = vmatpush1.msra.mxu0 0.0
  %512 = vmatprep.subr.mxu0 0.0
  %513 = vmatpush1.msra.mxu0 0.0
  %514 = vmatprep.subr.mxu0 0.0
  %515 = vmatpush1.msra.mxu0 0.0
  %516 = vmatprep.mubr.f32.mxu0 0.0
  %517 = vmatmul.mubr.f32.gmra.mrb[0].mxu0 %v450
  %v518 = vpop.f32.mrb[0].mxu0
  %v519 = vadd.f32 0.0, %v518
  %v520 = vpop.f32.mrb[0].mxu0
  %521 = vdwg.mxu0
  %v522 = vadd.f32 %v315, %v519
  %v523 = vxor.u32 %v522, 2147483648
  %v524 = vmul.f32 %v523, 1.442695
  %v525 = vpow.pop %v524
  %v526 = vadd.f32 %v525, 1.0
  %v527 = vrcp.pop %v526
  %v528 = vmul.f32 1.0, %v527
  %v529 = vmul.f32 %v528, 2.0
  %v530 = vsub.f32 %v529, 1.0
  %v531 = vmul.f32 %v528, %v440
  %533 = vrot.lane.b32.xlu0 %v530, 32
  %v534 = vpop.permute.xlu0 %533
  %v536 = vmul.f32 %v528, %v534
  %538 = vrot.lane.b32.xlu0 %v536, 32
  %v539 = vpop.permute.xlu0 %538
  %v541 = vadd.f32 %v531, %v539
  %v542 = vtanh.pop %v541
  %544 = vrot.lane.b32.xlu0 %v542, 32
  %v545 = vpop.permute.xlu0 %544
  %v547 = vmul.f32 %v528, %v545
  %549 = vrot.lane.b32.xlu0 %v547, 64
  %v550 = vpop.permute.xlu0 %549
  %v551 = vsel %vm218, %v550, 0
  %553 = vmatprep.subr.mxu0 0.0
  %554 = vmatpush1.msra.mxu0 %v15
  %555 = vmatprep.subr.mxu0 0.0
  %556 = vmatpush1.msra.mxu0 %v16
  %557 = vmatprep.subr.mxu0 0.0
  %558 = vmatpush1.msra.mxu0 %v17
  %559 = vmatprep.subr.mxu0 0.0
  %560 = vmatpush1.msra.mxu0 %v18
  %561 = vmatprep.subr.mxu0 0.0
  %562 = vmatpush1.msra.mxu0 0.0
  %563 = vmatprep.subr.mxu0 0.0
  %564 = vmatpush1.msra.mxu0 0.0
  %565 = vmatprep.subr.mxu0 0.0
  %566 = vmatpush1.msra.mxu0 0.0
  %567 = vmatprep.subr.mxu0 0.0
  %568 = vmatpush1.msra.mxu0 0.0
  %569 = vmatprep.subr.mxu0 0.0
  %570 = vmatpush1.msra.mxu0 0.0
  %571 = vmatprep.subr.mxu0 0.0
  %572 = vmatpush1.msra.mxu0 0.0
  %573 = vmatprep.subr.mxu0 0.0
  %574 = vmatpush1.msra.mxu0 0.0
  %575 = vmatprep.subr.mxu0 0.0
  %576 = vmatpush1.msra.mxu0 0.0
  %577 = vmatprep.subr.mxu0 0.0
  %578 = vmatpush1.msra.mxu0 0.0
  %579 = vmatprep.subr.mxu0 0.0
  %580 = vmatpush1.msra.mxu0 0.0
  %581 = vmatprep.subr.mxu0 0.0
  %582 = vmatpush1.msra.mxu0 0.0
  %583 = vmatprep.subr.mxu0 0.0
  %584 = vmatpush1.msra.mxu0 0.0
  %585 = vmatprep.subr.mxu0 0.0
  %586 = vmatpush1.msra.mxu0 0.0
  %587 = vmatprep.subr.mxu0 0.0
  %588 = vmatpush1.msra.mxu0 0.0
  %589 = vmatprep.subr.mxu0 0.0
  %590 = vmatpush1.msra.mxu0 0.0
  %591 = vmatprep.subr.mxu0 0.0
  %592 = vmatpush1.msra.mxu0 0.0
  %593 = vmatprep.subr.mxu0 0.0
  %594 = vmatpush1.msra.mxu0 0.0
  %595 = vmatprep.subr.mxu0 0.0
  %596 = vmatpush1.msra.mxu0 0.0
  %597 = vmatprep.subr.mxu0 0.0
  %598 = vmatpush1.msra.mxu0 0.0
  %599 = vmatprep.subr.mxu0 0.0
  %600 = vmatpush1.msra.mxu0 0.0
  %601 = vmatprep.subr.mxu0 0.0
  %602 = vmatpush1.msra.mxu0 0.0
  %603 = vmatprep.subr.mxu0 0.0
  %604 = vmatpush1.msra.mxu0 0.0
  %605 = vmatprep.subr.mxu0 0.0
  %606 = vmatpush1.msra.mxu0 0.0
  %607 = vmatprep.subr.mxu0 0.0
  %608 = vmatpush1.msra.mxu0 0.0
  %609 = vmatprep.subr.mxu0 0.0
  %610 = vmatpush1.msra.mxu0 0.0
  %611 = vmatprep.subr.mxu0 0.0
  %612 = vmatpush1.msra.mxu0 0.0
  %613 = vmatprep.subr.mxu0 0.0
  %614 = vmatpush1.msra.mxu0 0.0
  %615 = vmatprep.subr.mxu0 0.0
  %616 = vmatpush1.msra.mxu0 0.0
  %617 = vmatprep.mubr.f32.mxu0 0.0
  %618 = vmatmul.mubr.f32.gmra.mrb[0].mxu0 %v551
  %v619 = vpop.f32.mrb[0].mxu0
  %v620 = vadd.f32 0.0, %v619
  %v621 = vpop.f32.mrb[0].mxu0
  %622 = vdwg.mxu0
  %v623 = vadd.f32 %v320, %v620
  %v624 = vxor.u32 %v623, 2147483648
  %v625 = vmul.f32 %v624, 1.442695
  %v626 = vpow.pop %v625
  %v627 = vadd.f32 %v626, 1.0
  %v628 = vrcp.pop %v627
  %v629 = vmul.f32 1.0, %v628
  %v630 = vmul.f32 %v629, 2.0
  %v631 = vsub.f32 %v630, 1.0
  %v632 = vmul.f32 %v629, %v541
  %634 = vrot.lane.b32.xlu0 %v631, 32
  %v635 = vpop.permute.xlu0 %634
  %v637 = vmul.f32 %v629, %v635
  %639 = vrot.lane.b32.xlu0 %v637, 32
  %v640 = vpop.permute.xlu0 %639
  %v642 = vadd.f32 %v632, %v640
  %v643 = vtanh.pop %v642
  %645 = vrot.lane.b32.xlu0 %v643, 32
  %v646 = vpop.permute.xlu0 %645
  %v648 = vmul.f32 %v629, %v646
  %650 = vrot.lane.b32.xlu0 %v648, 64
  %v651 = vpop.permute.xlu0 %650
  %v652 = vsel %vm218, %v651, 0
  %654 = vmatprep.subr.mxu0 0.0
  %655 = vmatpush1.msra.mxu0 %v15
  %656 = vmatprep.subr.mxu0 0.0
  %657 = vmatpush1.msra.mxu0 %v16
  %658 = vmatprep.subr.mxu0 0.0
  %659 = vmatpush1.msra.mxu0 %v17
  %660 = vmatprep.subr.mxu0 0.0
  %661 = vmatpush1.msra.mxu0 %v18
  %662 = vmatprep.subr.mxu0 0.0
  %663 = vmatpush1.msra.mxu0 0.0
  %664 = vmatprep.subr.mxu0 0.0
  %665 = vmatpush1.msra.mxu0 0.0
  %666 = vmatprep.subr.mxu0 0.0
  %667 = vmatpush1.msra.mxu0 0.0
  %668 = vmatprep.subr.mxu0 0.0
  %669 = vmatpush1.msra.mxu0 0.0
  %670 = vmatprep.subr.mxu0 0.0
  %671 = vmatpush1.msra.mxu0 0.0
  %672 = vmatprep.subr.mxu0 0.0
  %673 = vmatpush1.msra.mxu0 0.0
  %674 = vmatprep.subr.mxu0 0.0
  %675 = vmatpush1.msra.mxu0 0.0
  %676 = vmatprep.subr.mxu0 0.0
  %677 = vmatpush1.msra.mxu0 0.0
  %678 = vmatprep.subr.mxu0 0.0
  %679 = vmatpush1.msra.mxu0 0.0
  %680 = vmatprep.subr.mxu0 0.0
  %681 = vmatpush1.msra.mxu0 0.0
  %682 = vmatprep.subr.mxu0 0.0
  %683 = vmatpush1.msra.mxu0 0.0
  %684 = vmatprep.subr.mxu0 0.0
  %685 = vmatpush1.msra.mxu0 0.0
  %686 = vmatprep.subr.mxu0 0.0
  %687 = vmatpush1.msra.mxu0 0.0
  %688 = vmatprep.subr.mxu0 0.0
  %689 = vmatpush1.msra.mxu0 0.0
  %690 = vmatprep.subr.mxu0 0.0
  %691 = vmatpush1.msra.mxu0 0.0
  %692 = vmatprep.subr.mxu0 0.0
  %693 = vmatpush1.msra.mxu0 0.0
  %694 = vmatprep.subr.mxu0 0.0
  %695 = vmatpush1.msra.mxu0 0.0
  %696 = vmatprep.subr.mxu0 0.0
  %697 = vmatpush1.msra.mxu0 0.0
  %698 = vmatprep.subr.mxu0 0.0
  %699 = vmatpush1.msra.mxu0 0.0
  %700 = vmatprep.subr.mxu0 0.0
  %701 = vmatpush1.msra.mxu0 0.0
  %702 = vmatprep.subr.mxu0 0.0
  %703 = vmatpush1.msra.mxu0 0.0
  %704 = vmatprep.subr.mxu0 0.0
  %705 = vmatpush1.msra.mxu0 0.0
  %706 = vmatprep.subr.mxu0 0.0
  %707 = vmatpush1.msra.mxu0 0.0
  %708 = vmatprep.subr.mxu0 0.0
  %709 = vmatpush1.msra.mxu0 0.0
  %710 = vmatprep.subr.mxu0 0.0
  %711 = vmatpush1.msra.mxu0 0.0
  %712 = vmatprep.subr.mxu0 0.0
  %713 = vmatpush1.msra.mxu0 0.0
  %714 = vmatprep.subr.mxu0 0.0
  %715 = vmatpush1.msra.mxu0 0.0
  %716 = vmatprep.subr.mxu0 0.0
  %717 = vmatpush1.msra.mxu0 0.0
  %718 = vmatprep.mubr.f32.mxu0 0.0
  %719 = vmatmul.mubr.f32.gmra.mrb[0].mxu0 %v652
  %v720 = vpop.f32.mrb[0].mxu0
  %v721 = vadd.f32 0.0, %v720
  %v722 = vpop.f32.mrb[0].mxu0
  %723 = vdwg.mxu0
  %v724 = vadd.f32 %v325, %v721
  %v725 = vxor.u32 %v724, 2147483648
  %v726 = vmul.f32 %v725, 1.442695
  %v727 = vpow.pop %v726
  %v728 = vadd.f32 %v727, 1.0
  %v729 = vrcp.pop %v728
  %v730 = vmul.f32 1.0, %v729
  %v731 = vmul.f32 %v730, 2.0
  %v732 = vsub.f32 %v731, 1.0
  %v733 = vmul.f32 %v730, %v642
  %735 = vrot.lane.b32.xlu0 %v732, 32
  %v736 = vpop.permute.xlu0 %735
  %v738 = vmul.f32 %v730, %v736
  %740 = vrot.lane.b32.xlu0 %v738, 32
  %v741 = vpop.permute.xlu0 %740
  %v743 = vadd.f32 %v733, %v741
  %v744 = vtanh.pop %v743
  %746 = vrot.lane.b32.xlu0 %v744, 32
  %v747 = vpop.permute.xlu0 %746
  %v749 = vmul.f32 %v730, %v747
  %751 = vrot.lane.b32.xlu0 %v749, 64
  %v752 = vpop.permute.xlu0 %751
  %v753 = vsel %vm218, %v752, 0
  %755 = vmatprep.subr.mxu0 0.0
  %756 = vmatpush1.msra.mxu0 %v15
  %757 = vmatprep.subr.mxu0 0.0
  %758 = vmatpush1.msra.mxu0 %v16
  %759 = vmatprep.subr.mxu0 0.0
  %760 = vmatpush1.msra.mxu0 %v17
  %761 = vmatprep.subr.mxu0 0.0
  %762 = vmatpush1.msra.mxu0 %v18
  %763 = vmatprep.subr.mxu0 0.0
  %764 = vmatpush1.msra.mxu0 0.0
  %765 = vmatprep.subr.mxu0 0.0
  %766 = vmatpush1.msra.mxu0 0.0
  %767 = vmatprep.subr.mxu0 0.0
  %768 = vmatpush1.msra.mxu0 0.0
  %769 = vmatprep.subr.mxu0 0.0
  %770 = vmatpush1.msra.mxu0 0.0
  %771 = vmatprep.subr.mxu0 0.0
  %772 = vmatpush1.msra.mxu0 0.0
  %773 = vmatprep.subr.mxu0 0.0
  %774 = vmatpush1.msra.mxu0 0.0
  %775 = vmatprep.subr.mxu0 0.0
  %776 = vmatpush1.msra.mxu0 0.0
  %777 = vmatprep.subr.mxu0 0.0
  %778 = vmatpush1.msra.mxu0 0.0
  %779 = vmatprep.subr.mxu0 0.0
  %780 = vmatpush1.msra.mxu0 0.0
  %781 = vmatprep.subr.mxu0 0.0
  %782 = vmatpush1.msra.mxu0 0.0
  %783 = vmatprep.subr.mxu0 0.0
  %784 = vmatpush1.msra.mxu0 0.0
  %785 = vmatprep.subr.mxu0 0.0
  %786 = vmatpush1.msra.mxu0 0.0
  %787 = vmatprep.subr.mxu0 0.0
  %788 = vmatpush1.msra.mxu0 0.0
  %789 = vmatprep.subr.mxu0 0.0
  %790 = vmatpush1.msra.mxu0 0.0
  %791 = vmatprep.subr.mxu0 0.0
  %792 = vmatpush1.msra.mxu0 0.0
  %793 = vmatprep.subr.mxu0 0.0
  %794 = vmatpush1.msra.mxu0 0.0
  %795 = vmatprep.subr.mxu0 0.0
  %796 = vmatpush1.msra.mxu0 0.0
  %797 = vmatprep.subr.mxu0 0.0
  %798 = vmatpush1.msra.mxu0 0.0
  %799 = vmatprep.subr.mxu0 0.0
  %800 = vmatpush1.msra.mxu0 0.0
  %801 = vmatprep.subr.mxu0 0.0
  %802 = vmatpush1.msra.mxu0 0.0
  %803 = vmatprep.subr.mxu0 0.0
  %804 = vmatpush1.msra.mxu0 0.0
  %805 = vmatprep.subr.mxu0 0.0
  %806 = vmatpush1.msra.mxu0 0.0
  %807 = vmatprep.subr.mxu0 0.0
  %808 = vmatpush1.msra.mxu0 0.0
  %809 = vmatprep.subr.mxu0 0.0
  %810 = vmatpush1.msra.mxu0 0.0
  %811 = vmatprep.subr.mxu0 0.0
  %812 = vmatpush1.msra.mxu0 0.0
  %813 = vmatprep.subr.mxu0 0.0
  %814 = vmatpush1.msra.mxu0 0.0
  %815 = vmatprep.subr.mxu0 0.0
  %816 = vmatpush1.msra.mxu0 0.0
  %817 = vmatprep.subr.mxu0 0.0
  %818 = vmatpush1.msra.mxu0 0.0
  %819 = vmatprep.mubr.f32.mxu0 0.0
  %820 = vmatmul.mubr.f32.gmra.mrb[0].mxu0 %v753
  %v821 = vpop.f32.mrb[0].mxu0
  %v822 = vadd.f32 0.0, %v821
  %v823 = vpop.f32.mrb[0].mxu0
  %824 = vdwg.mxu0
  %v825 = vadd.f32 %v330, %v822
  %v826 = vxor.u32 %v825, 2147483648
  %v827 = vmul.f32 %v826, 1.442695
  %v828 = vpow.pop %v827
  %v829 = vadd.f32 %v828, 1.0
  %v830 = vrcp.pop %v829
  %v831 = vmul.f32 1.0, %v830
  %v832 = vmul.f32 %v831, 2.0
  %v833 = vsub.f32 %v832, 1.0
  %v834 = vmul.f32 %v831, %v743
  %836 = vrot.lane.b32.xlu0 %v833, 32
  %v837 = vpop.permute.xlu0 %836
  %v839 = vmul.f32 %v831, %v837
  %841 = vrot.lane.b32.xlu0 %v839, 32
  %v842 = vpop.permute.xlu0 %841
  %v844 = vadd.f32 %v834, %v842
  %v845 = vtanh.pop %v844
  %847 = vrot.lane.b32.xlu0 %v845, 32
  %v848 = vpop.permute.xlu0 %847
  %v850 = vmul.f32 %v831, %v848
  %852 = vrot.lane.b32.xlu0 %v850, 64
  %v853 = vpop.permute.xlu0 %852
  %v854 = vsel %vm218, %v853, 0
  %856 = vmatprep.subr.mxu0 0.0
  %857 = vmatpush1.msra.mxu0 %v15
  %858 = vmatprep.subr.mxu0 0.0
  %859 = vmatpush1.msra.mxu0 %v16
  %860 = vmatprep.subr.mxu0 0.0
  %861 = vmatpush1.msra.mxu0 %v17
  %862 = vmatprep.subr.mxu0 0.0
  %863 = vmatpush1.msra.mxu0 %v18
  %864 = vmatprep.subr.mxu0 0.0
  %865 = vmatpush1.msra.mxu0 0.0
  %866 = vmatprep.subr.mxu0 0.0
  %867 = vmatpush1.msra.mxu0 0.0
  %868 = vmatprep.subr.mxu0 0.0
  %869 = vmatpush1.msra.mxu0 0.0
  %870 = vmatprep.subr.mxu0 0.0
  %871 = vmatpush1.msra.mxu0 0.0
  %872 = vmatprep.subr.mxu0 0.0
  %873 = vmatpush1.msra.mxu0 0.0
  %874 = vmatprep.subr.mxu0 0.0
  %875 = vmatpush1.msra.mxu0 0.0
  %876 = vmatprep.subr.mxu0 0.0
  %877 = vmatpush1.msra.mxu0 0.0
  %878 = vmatprep.subr.mxu0 0.0
  %879 = vmatpush1.msra.mxu0 0.0
  %880 = vmatprep.subr.mxu0 0.0
  %881 = vmatpush1.msra.mxu0 0.0
  %882 = vmatprep.subr.mxu0 0.0
  %883 = vmatpush1.msra.mxu0 0.0
  %884 = vmatprep.subr.mxu0 0.0
  %885 = vmatpush1.msra.mxu0 0.0
  %886 = vmatprep.subr.mxu0 0.0
  %887 = vmatpush1.msra.mxu0 0.0
  %888 = vmatprep.subr.mxu0 0.0
  %889 = vmatpush1.msra.mxu0 0.0
  %890 = vmatprep.subr.mxu0 0.0
  %891 = vmatpush1.msra.mxu0 0.0
  %892 = vmatprep.subr.mxu0 0.0
  %893 = vmatpush1.msra.mxu0 0.0
  %894 = vmatprep.subr.mxu0 0.0
  %895 = vmatpush1.msra.mxu0 0.0
  %896 = vmatprep.subr.mxu0 0.0
  %897 = vmatpush1.msra.mxu0 0.0
  %898 = vmatprep.subr.mxu0 0.0
  %899 = vmatpush1.msra.mxu0 0.0
  %900 = vmatprep.subr.mxu0 0.0
  %901 = vmatpush1.msra.mxu0 0.0
  %902 = vmatprep.subr.mxu0 0.0
  %903 = vmatpush1.msra.mxu0 0.0
  %904 = vmatprep.subr.mxu0 0.0
  %905 = vmatpush1.msra.mxu0 0.0
  %906 = vmatprep.subr.mxu0 0.0
  %907 = vmatpush1.msra.mxu0 0.0
  %908 = vmatprep.subr.mxu0 0.0
  %909 = vmatpush1.msra.mxu0 0.0
  %910 = vmatprep.subr.mxu0 0.0
  %911 = vmatpush1.msra.mxu0 0.0
  %912 = vmatprep.subr.mxu0 0.0
  %913 = vmatpush1.msra.mxu0 0.0
  %914 = vmatprep.subr.mxu0 0.0
  %915 = vmatpush1.msra.mxu0 0.0
  %916 = vmatprep.subr.mxu0 0.0
  %917 = vmatpush1.msra.mxu0 0.0
  %918 = vmatprep.subr.mxu0 0.0
  %919 = vmatpush1.msra.mxu0 0.0
  %920 = vmatprep.mubr.f32.mxu0 0.0
  %921 = vmatmul.mubr.f32.gmra.mrb[0].mxu0 %v854
  %v922 = vpop.f32.mrb[0].mxu0
  %v923 = vadd.f32 0.0, %v922
  %v924 = vpop.f32.mrb[0].mxu0
  %925 = vdwg.mxu0
  %v926 = vadd.f32 %v335, %v923
  %v927 = vxor.u32 %v926, 2147483648
  %v928 = vmul.f32 %v927, 1.442695
  %v929 = vpow.pop %v928
  %v930 = vadd.f32 %v929, 1.0
  %v931 = vrcp.pop %v930
  %v932 = vmul.f32 1.0, %v931
  %v933 = vmul.f32 %v932, 2.0
  %v934 = vsub.f32 %v933, 1.0
  %v935 = vmul.f32 %v932, %v844
  %937 = vrot.lane.b32.xlu0 %v934, 32
  %v938 = vpop.permute.xlu0 %937
  %v940 = vmul.f32 %v932, %v938
  %942 = vrot.lane.b32.xlu0 %v940, 32
  %v943 = vpop.permute.xlu0 %942
  %v945 = vadd.f32 %v935, %v943
  %v946 = vtanh.pop %v945
  %948 = vrot.lane.b32.xlu0 %v946, 32
  %v949 = vpop.permute.xlu0 %948
  %v951 = vmul.f32 %v932, %v949
  %953 = vrot.lane.b32.xlu0 %v951, 64
  %v954 = vpop.permute.xlu0 %953
  %v955 = vsel %vm218, %v954, 0
  %957 = vmatprep.subr.mxu0 0.0
  %958 = vmatpush1.msra.mxu0 %v15
  %959 = vmatprep.subr.mxu0 0.0
  %960 = vmatpush1.msra.mxu0 %v16
  %961 = vmatprep.subr.mxu0 0.0
  %962 = vmatpush1.msra.mxu0 %v17
  %963 = vmatprep.subr.mxu0 0.0
  %964 = vmatpush1.msra.mxu0 %v18
  %965 = vmatprep.subr.mxu0 0.0
  %966 = vmatpush1.msra.mxu0 0.0
  %967 = vmatprep.subr.mxu0 0.0
  %968 = vmatpush1.msra.mxu0 0.0
  %969 = vmatprep.subr.mxu0 0.0
  %970 = vmatpush1.msra.mxu0 0.0
  %971 = vmatprep.subr.mxu0 0.0
  %972 = vmatpush1.msra.mxu0 0.0
  %973 = vmatprep.subr.mxu0 0.0
  %974 = vmatpush1.msra.mxu0 0.0
  %975 = vmatprep.subr.mxu0 0.0
  %976 = vmatpush1.msra.mxu0 0.0
  %977 = vmatprep.subr.mxu0 0.0
  %978 = vmatpush1.msra.mxu0 0.0
  %979 = vmatprep.subr.mxu0 0.0
  %980 = vmatpush1.msra.mxu0 0.0
  %981 = vmatprep.subr.mxu0 0.0
  %982 = vmatpush1.msra.mxu0 0.0
  %983 = vmatprep.subr.mxu0 0.0
  %984 = vmatpush1.msra.mxu0 0.0
  %985 = vmatprep.subr.mxu0 0.0
  %986 = vmatpush1.msra.mxu0 0.0
  %987 = vmatprep.subr.mxu0 0.0
  %988 = vmatpush1.msra.mxu0 0.0
  %989 = vmatprep.subr.mxu0 0.0
  %990 = vmatpush1.msra.mxu0 0.0
  %991 = vmatprep.subr.mxu0 0.0
  %992 = vmatpush1.msra.mxu0 0.0
  %993 = vmatprep.subr.mxu0 0.0
  %994 = vmatpush1.msra.mxu0 0.0
  %995 = vmatprep.subr.mxu0 0.0
  %996 = vmatpush1.msra.mxu0 0.0
  %997 = vmatprep.subr.mxu0 0.0
  %998 = vmatpush1.msra.mxu0 0.0
  %999 = vmatprep.subr.mxu0 0.0
  %1000 = vmatpush1.msra.mxu0 0.0
  %1001 = vmatprep.subr.mxu0 0.0
  %1002 = vmatpush1.msra.mxu0 0.0
  %1003 = vmatprep.subr.mxu0 0.0
  %1004 = vmatpush1.msra.mxu0 0.0
  %1005 = vmatprep.subr.mxu0 0.0
  %1006 = vmatpush1.msra.mxu0 0.0
  %1007 = vmatprep.subr.mxu0 0.0
  %1008 = vmatpush1.msra.mxu0 0.0
  %1009 = vmatprep.subr.mxu0 0.0
  %1010 = vmatpush1.msra.mxu0 0.0
  %1011 = vmatprep.subr.mxu0 0.0
  %1012 = vmatpush1.msra.mxu0 0.0
  %1013 = vmatprep.subr.mxu0 0.0
  %1014 = vmatpush1.msra.mxu0 0.0
  %1015 = vmatprep.subr.mxu0 0.0
  %1016 = vmatpush1.msra.mxu0 0.0
  %1017 = vmatprep.subr.mxu0 0.0
  %1018 = vmatpush1.msra.mxu0 0.0
  %1019 = vmatprep.subr.mxu0 0.0
  %1020 = vmatpush1.msra.mxu0 0.0
  %1021 = vmatprep.mubr.f32.mxu0 0.0
  %1022 = vmatmul.mubr.f32.gmra.mrb[0].mxu0 %v955
  %v1023 = vpop.f32.mrb[0].mxu0
  %v1024 = vadd.f32 0.0, %v1023
  %v1025 = vpop.f32.mrb[0].mxu0
  %1026 = vdwg.mxu0
  %v1027 = vadd.f32 %v340, %v1024
  %v1028 = vxor.u32 %v1027, 2147483648
  %v1029 = vmul.f32 %v1028, 1.442695
  %v1030 = vpow.pop %v1029
  %v1031 = vadd.f32 %v1030, 1.0
  %v1032 = vrcp.pop %v1031
  %v1033 = vmul.f32 1.0, %v1032
  %v1034 = vmul.f32 %v1033, 2.0
  %v1035 = vsub.f32 %v1034, 1.0
  %v1036 = vmul.f32 %v1033, %v945
  %1038 = vrot.lane.b32.xlu0 %v1035, 32
  %v1039 = vpop.permute.xlu0 %1038
  %v1041 = vmul.f32 %v1033, %v1039
  %1043 = vrot.lane.b32.xlu0 %v1041, 32
  %v1044 = vpop.permute.xlu0 %1043
  %v1046 = vadd.f32 %v1036, %v1044
  %v1047 = vtanh.pop %v1046
  %1049 = vrot.lane.b32.xlu0 %v1047, 32
  %v1050 = vpop.permute.xlu0 %1049
  %v1052 = vmul.f32 %v1033, %v1050
  %1054 = vrot.lane.b32.xlu0 %v1052, 64
  %v1055 = vpop.permute.xlu0 %1054
  %v1056 = vsel %vm218, %v1055, 0
  %1058 = vmatprep.subr.mxu0 0.0
  %1059 = vmatpush1.msra.mxu0 %v15
  %1060 = vmatprep.subr.mxu0 0.0
  %1061 = vmatpush1.msra.mxu0 %v16
  %1062 = vmatprep.subr.mxu0 0.0
  %1063 = vmatpush1.msra.mxu0 %v17
  %1064 = vmatprep.subr.mxu0 0.0
  %1065 = vmatpush1.msra.mxu0 %v18
  %1066 = vmatprep.subr.mxu0 0.0
  %1067 = vmatpush1.msra.mxu0 0.0
  %1068 = vmatprep.subr.mxu0 0.0
  %1069 = vmatpush1.msra.mxu0 0.0
  %1070 = vmatprep.subr.mxu0 0.0
  %1071 = vmatpush1.msra.mxu0 0.0
  %1072 = vmatprep.subr.mxu0 0.0
  %1073 = vmatpush1.msra.mxu0 0.0
  %1074 = vmatprep.subr.mxu0 0.0
  %1075 = vmatpush1.msra.mxu0 0.0
  %1076 = vmatprep.subr.mxu0 0.0
  %1077 = vmatpush1.msra.mxu0 0.0
  %1078 = vmatprep.subr.mxu0 0.0
  %1079 = vmatpush1.msra.mxu0 0.0
  %1080 = vmatprep.subr.mxu0 0.0
  %1081 = vmatpush1.msra.mxu0 0.0
  %1082 = vmatprep.subr.mxu0 0.0
  %1083 = vmatpush1.msra.mxu0 0.0
  %1084 = vmatprep.subr.mxu0 0.0
  %1085 = vmatpush1.msra.mxu0 0.0
  %1086 = vmatprep.subr.mxu0 0.0
  %1087 = vmatpush1.msra.mxu0 0.0
  %1088 = vmatprep.subr.mxu0 0.0
  %1089 = vmatpush1.msra.mxu0 0.0
  %1090 = vmatprep.subr.mxu0 0.0
  %1091 = vmatpush1.msra.mxu0 0.0
  %1092 = vmatprep.subr.mxu0 0.0
  %1093 = vmatpush1.msra.mxu0 0.0
  %1094 = vmatprep.subr.mxu0 0.0
  %1095 = vmatpush1.msra.mxu0 0.0
  %1096 = vmatprep.subr.mxu0 0.0
  %1097 = vmatpush1.msra.mxu0 0.0
  %1098 = vmatprep.subr.mxu0 0.0
  %1099 = vmatpush1.msra.mxu0 0.0
  %1100 = vmatprep.subr.mxu0 0.0
  %1101 = vmatpush1.msra.mxu0 0.0
  %1102 = vmatprep.subr.mxu0 0.0
  %1103 = vmatpush1.msra.mxu0 0.0
  %1104 = vmatprep.subr.mxu0 0.0
  %1105 = vmatpush1.msra.mxu0 0.0
  %1106 = vmatprep.subr.mxu0 0.0
  %1107 = vmatpush1.msra.mxu0 0.0
  %1108 = vmatprep.subr.mxu0 0.0
  %1109 = vmatpush1.msra.mxu0 0.0
  %1110 = vmatprep.subr.mxu0 0.0
  %1111 = vmatpush1.msra.mxu0 0.0
  %1112 = vmatprep.subr.mxu0 0.0
  %1113 = vmatpush1.msra.mxu0 0.0
  %1114 = vmatprep.subr.mxu0 0.0
  %1115 = vmatpush1.msra.mxu0 0.0
  %1116 = vmatprep.subr.mxu0 0.0
  %1117 = vmatpush1.msra.mxu0 0.0
  %1118 = vmatprep.subr.mxu0 0.0
  %1119 = vmatpush1.msra.mxu0 0.0
  %1120 = vmatprep.subr.mxu0 0.0
  %1121 = vmatpush1.msra.mxu0 0.0
  %1122 = vmatprep.mubr.f32.mxu0 0.0
  %1123 = vmatmul.mubr.f32.gmra.mrb[0].mxu0 %v1056
  %v1124 = vpop.f32.mrb[0].mxu0
  %v1125 = vadd.f32 0.0, %v1124
  %v1126 = vpop.f32.mrb[0].mxu0
  %1127 = vdwg.mxu0
  %v1128 = vadd.f32 %v345, %v1125
  %v1129 = vxor.u32 %v1128, 2147483648
  %v1130 = vmul.f32 %v1129, 1.442695
  %v1131 = vpow.pop %v1130
  %v1132 = vadd.f32 %v1131, 1.0
  %v1133 = vrcp.pop %v1132
  %v1134 = vmul.f32 1.0, %v1133
  %v1135 = vmul.f32 %v1134, 2.0
  %v1136 = vsub.f32 %v1135, 1.0
  %v1137 = vmul.f32 %v1134, %v1046
  %1139 = vrot.lane.b32.xlu0 %v1136, 32
  %v1140 = vpop.permute.xlu0 %1139
  %v1142 = vmul.f32 %v1134, %v1140
  %1144 = vrot.lane.b32.xlu0 %v1142, 32
  %v1145 = vpop.permute.xlu0 %1144
  %v1147 = vadd.f32 %v1137, %v1145
  %v1148 = vtanh.pop %v1147
  %1150 = vrot.lane.b32.xlu0 %v1148, 32
  %v1151 = vpop.permute.xlu0 %1150
  %v1153 = vmul.f32 %v1134, %v1151
  %v1154 = vlaneseq
  %v1155 = vshrl.u32 %v1154, 7
  %v1156 = vsub.s32 0, %v1155
  %v1157 = vrot.slane %v22, %v1156
  %1159 = vrot.lane.b32.xlu0 %v1157, 64
  %v1160 = vpop.permute.xlu0 %1159
  %v1162 = vmul.f32 %v1153, %v1160
  %1164 = vrot.lane.b32.xlu0 %v1162, 64
  %v1165 = vpop.permute.xlu0 %1164
  %v1167 = vsel %vm218, %v1165, 0.0
  %1168 = vadd.xlane.f32.xlu0 %v1167
  %v1169 = vpop.xlane.xlu0 %1168
  %v1170 = vlaneseq
  %v1171 = vshrl.u32 %v1170, 7
  %v1172 = vsub.s32 0, %v1171
  %v1173 = vrot.slane %v23, %v1172
  %v1174 = vadd.f32 %v1169, %v1173
  %v1175 = vxor.u32 %v1174, 2147483648
  %v1176 = vmul.f32 %v1175, 1.442695
  %v1177 = vpow.pop %v1176
  %v1178 = vadd.f32 %v1177, 1.0
  %v1179 = vrcp.pop %v1178
  %v1180 = vmul.f32 1.0, %v1179
  %vm1181 = vcmask 7168
  %1182 = vst.msk [vmem:[%s2] sm:$0xff] %vm1181, %v1180
  // Predicated region
  $region10: #{surrogate_forward.1} parent=0 // pred_check
    _
  $region11: #{surrogate_forward.1} parent=0 // pred_check_branch
    %1184 = sbr.rel (0) target = $region13
  $region12: #{surrogate_forward.1} parent=0 // pred_region
    _
  $region13: #{surrogate_forward.1} parent=0 // pred_fallthru
    _
  // Predicated region
  $region14: #{surrogate_forward.1} parent=0 // pred_check
    _
  $region15: #{surrogate_forward.1} parent=0 // pred_check_branch
    %1186 = sbr.rel (0) target = $region17
  $region16: #{surrogate_forward.1} parent=0 // pred_region
    _
  $region17: #{surrogate_forward.1} parent=0 // pred_fallthru
    _

</llo_original>
